<compile_context>
chip_gen: v5e
topology: v5e:2x2
jax: 0.10.0
libtpu: 0.0.40
codegen_flags: <defaults>
</compile_context>

<pallas_src>
import functools
import math

import jax
import jax.numpy as jnp
from jax import lax
from jax.experimental import pallas as pl
from jax.experimental.pallas import tpu as pltpu

LANES = 128
SUBLANES = 8
CHUNK_ROWS = 64  # (64, 128) f32 chunk = 8 vregs per operand per loop step


def _cdiv(a, b):
    return (a + b - 1) // b


def _round_up(x, m):
    return _cdiv(x, m) * m


def _preferred_tile_rows():
    """Row-tile size tuned per TPU generation (block = tile_rows x 128 elems)."""
    try:
        kind = jax.devices()[0].device_kind.lower()
    except Exception:
        kind = ""
    if "7" in kind:
        # v7x: ~3.2 TB/s per TC -> bigger tiles; 2 MiB f32 block, 8 MiB double-buffered.
        return 4096
    # v6e / v5e: 1 MiB f32 block, 4 MiB double-buffered (fits the 16 MiB scoped default).
    return 2048


def _sublane_granularity(dtype):
    # 8 sublane rows for 4-byte dtypes, 16 for 2-byte, 32 for 1-byte (packing).
    return max(SUBLANES, SUBLANES * 4 // jnp.dtype(dtype).itemsize)


def _rmspe_kernel(logit_ref, target_ref, partial_ref, *,
                  rows_total, tile_rows, chunk_rows, steps, uniform):
    c = pl.program_id(0)
    s = pl.program_id(1)

    @pl.when(s == 0)
    def _():
        partial_ref[...] = jnp.zeros_like(partial_ref)

    def _chunk_sq(off):
        # In-kernel .float(): native-dtype tiles are cast per chunk (halves HBM
        # reads for bf16/f16 inputs and removes the host-side convert pass).
        t = target_ref[pl.ds(off, chunk_rows), :].astype(jnp.float32)
        l = logit_ref[pl.ds(off, chunk_rows), :].astype(jnp.float32)
        # (t - l) / t via EUP approx reciprocal + one Newton-Raphson refinement.
        r = pl.reciprocal(t, approx=True)
        r = r * (2.0 - t * r)
        e = (t - l) * r
        return e * e

    def _fold(sq, acc):
        # Fold the chunk into one vreg-shaped (8, 128) partial: pure VPU adds,
        # cross-lane reduction deferred to the host.
        return acc + jnp.sum(
            sq.reshape(chunk_rows // SUBLANES, SUBLANES, LANES), axis=0)

    def body_plain(i, acc):
        off = pl.multiple_of(i * chunk_rows, chunk_rows)
        return _fold(_chunk_sq(off), acc)

    zero = jnp.zeros((SUBLANES, LANES), jnp.float32)

    if uniform:
        # Hot path: every block is completely valid (static trip count, no mask).
        acc = lax.fori_loop(0, tile_rows // chunk_rows, body_plain, zero)
        partial_ref[...] += acc
    else:
        block_idx = c * steps + s
        valid = jnp.clip(rows_total - block_idx * tile_rows, 0, tile_rows)

        @pl.when(valid == tile_rows)
        def _():
            acc = lax.fori_loop(0, tile_rows // chunk_rows, body_plain, zero)
            partial_ref[...] += acc

        @pl.when(valid < tile_rows)
        def _():
            # Ragged tail (or the clamped duplicate block on the 2-core split):
            # mask invalid rows to 0 with a select (garbage never propagates).
            def body_masked(i, acc):
                off = pl.multiple_of(i * chunk_rows, chunk_rows)
                sq = _chunk_sq(off)
                row = off + lax.broadcasted_iota(jnp.int32, (chunk_rows, LANES), 0)
                sq = jnp.where(row < valid, sq, 0.0)
                return _fold(sq, acc)

            n_chunks = (valid + chunk_rows - 1) // chunk_rows
            acc = lax.fori_loop(0, n_chunks, body_masked, zero)
            partial_ref[...] += acc


def rmspe_loss(logit, target):
    """Pallas TPU implementation of RMSPELoss.forward. Returns a float32 scalar."""
    assert logit.shape == target.shape, "logit/target must have the same shape"

    def _prep(x):
        x = jnp.reshape(x, (-1,))
        if x.dtype not in (jnp.float32, jnp.bfloat16, jnp.float16):
            x = x.astype(jnp.float32)  # ints / f64 -> f32 on host; floats cast in-kernel
        return x

    l = _prep(logit)
    t = _prep(target)
    n_total = l.shape[0]

    # Minimal lane-dense 2-D layout granularity (8x128 f32, 16x128 bf16/f16).
    gran = max(_sublane_granularity(l.dtype), _sublane_granularity(t.dtype))
    padded_n = _round_up(n_total, LANES * gran)
    if padded_n != n_total:
        # Tiny pad (< gran*128 elems) with 1.0 -> padded elements contribute exactly 0.
        l = jnp.pad(l, (0, padded_n - n_total), constant_values=1.0)
        t = jnp.pad(t, (0, padded_n - n_total), constant_values=1.0)

    rows = padded_n // LANES  # multiple of `gran`
    logit2d = l.reshape(rows, LANES)
    target2d = t.reshape(rows, LANES)

    preferred = _preferred_tile_rows()
    if rows >= preferred:
        tile_rows = preferred                    # multiple of CHUNK_ROWS
        chunk_rows = CHUNK_ROWS
    else:
        tile_rows = rows                         # single block
        chunk_rows = math.gcd(rows, CHUNK_ROWS)  # divides tile_rows, >= gran

    total_blocks = _cdiv(rows, tile_rows)
    # Leading size-2 "parallel" axis: shards row blocks across both TensorCores
    # on dual-core parts; a cheap sequential loop on single-core chips.
    num_cores = 2 if total_blocks >= 2 else 1
    steps = _cdiv(total_blocks, num_cores)
    uniform = (rows % tile_rows == 0) and (num_cores * steps == total_blocks)

    kernel = functools.partial(
        _rmspe_kernel,
        rows_total=rows, tile_rows=tile_rows, chunk_rows=chunk_rows,
        steps=steps, uniform=uniform)

    def in_map(c, s):
        # Clamp so the (possible) extra step on the second core re-reads the
        # last block; the kernel masks it to zero via `valid`.
        return (jnp.minimum(c * steps + s, total_blocks - 1), 0)

    in_bytes = (logit2d.size * logit2d.dtype.itemsize
                + target2d.size * target2d.dtype.itemsize)
    cost = pl.CostEstimate(
        flops=8 * n_total,
        transcendentals=n_total,
        bytes_accessed=in_bytes + num_cores * SUBLANES * LANES * 4)

    partials = pl.pallas_call(
        kernel,
        out_shape=jax.ShapeDtypeStruct((num_cores * SUBLANES, LANES), jnp.float32),
        grid_spec=pltpu.PrefetchScalarGridSpec(
            num_scalar_prefetch=0,
            grid=(num_cores, steps),  # reduction axis (s) innermost
            in_specs=[
                pl.BlockSpec((tile_rows, LANES), in_map),
                pl.BlockSpec((tile_rows, LANES), in_map),
            ],
            # Output block is the VMEM-resident (8, 128) accumulator per core.
            out_specs=pl.BlockSpec((SUBLANES, LANES), lambda c, s: (c, 0)),
        ),
        # TODO(synk): on v7x, switch axis 0 to pltpu.CORE_PARALLEL once verified
        # so both TensorCores are guaranteed to engage.
        compiler_params=pltpu.CompilerParams(
            dimension_semantics=("parallel", "arbitrary"),
        ),
        cost_estimate=cost,
    )(logit2d, target2d)

    # Tiny final reduce / mean / sqrt in plain JAX (num_cores * 1024 elements).
    return jnp.sqrt(jnp.sum(partials) / jnp.float32(n_total))


def rmspe_loss_ref(logit, target):
    t = target.astype(jnp.float32)
    l = logit.astype(jnp.float32)
    return jnp.sqrt(jnp.mean(jnp.square((t - l) / t)))


if __name__ == "__main__":
    key = jax.random.PRNGKey(0)
    k1, k2 = jax.random.split(key)

    # Small example shapes: 2 x 4 x 16 x 16 = 2048 elems -> (16, 128) slab,
    # single block, single grid step, no host-side padding needed.
    shape = (2, 4, 16, 16)
    logit = jax.random.normal(k1, shape, dtype=jnp.float32)
    # Keep targets away from zero so the relative error is well-defined.
    target = jax.random.uniform(k2, shape, dtype=jnp.float32, minval=0.5, maxval=2.0)

    loss = rmspe_loss(logit, target)
    jax.block_until_ready(loss)

    ref = rmspe_loss_ref(logit, target)
    assert jnp.allclose(loss, ref, rtol=1e-5, atol=1e-5), (loss, ref)

    print("KERNEL_OK")
</pallas_src>

<mosaic_0001>
module attributes {stable_mosaic.version = 11 : i64} {
  func.func @_rmspe_kernel(%arg0: i32, %arg1: i32, %arg2: memref<16x128xf32, #tpu.memory_space<vmem>>, %arg3: memref<16x128xf32, #tpu.memory_space<vmem>>, %arg4: memref<8x128xf32, #tpu.memory_space<vmem>>) attributes {dimension_semantics = [#tpu.dimension_semantics<parallel>, #tpu.dimension_semantics<arbitrary>], iteration_bounds = array<i64: 1, 1>, scalar_prefetch = 0 : i64, scratch_operands = 0 : i64, tpu.core_type = #tpu.core_type<tc>, window_params = [{transform_indices = @transform_0, window_bounds = array<i64: 16, 128>}, {transform_indices = @transform_1, window_bounds = array<i64: 16, 128>}, {transform_indices = @transform_2, window_bounds = array<i64: 8, 128>}]} {
    %c0_i32 = arith.constant 0 : i32
    %0 = arith.cmpi eq, %arg1, %c0_i32 : i32
    %1 = arith.extui %0 : i1 to i32
    %c0_i32_0 = arith.constant 0 : i32
    %2 = arith.cmpi ne, %1, %c0_i32_0 : i32
    scf.if %2 {
      %cst_9 = arith.constant 0.000000e+00 : f32
      %24 = vector.broadcast %cst_9 : f32 to vector<8x128xf32>
      %c0_10 = arith.constant 0 : index
      %c0_11 = arith.constant 0 : index
      %25 = vector.load %arg4[%c0_10, %c0_11] : memref<8x128xf32, #tpu.memory_space<vmem>>, vector<8x128xf32>
      tpu.vector_store %arg4[%c0_10, %c0_11], %24 {strides = array<i32>} : memref<8x128xf32, #tpu.memory_space<vmem>>, vector<8x128xf32>,
    } else {
    }
    %cst = arith.constant 0.000000e+00 : f32
    %3 = vector.broadcast %cst : f32 to vector<8x128xf32>
    %c0_i32_1 = arith.constant 0 : i32
    %c16_i32 = arith.constant 16 : i32
    %4 = arith.muli %c0_i32_1, %c16_i32 : i32
    %5 = tpu.assume_multiple %4, 16 : i32
    %6 = arith.index_cast %5 : i32 to index
    %c0 = arith.constant 0 : index
    %7 = vector.load %arg3[%6, %c0] : memref<16x128xf32, #tpu.memory_space<vmem>>, vector<16x128xf32>
    %8 = arith.index_cast %5 : i32 to index
    %c0_2 = arith.constant 0 : index
    %9 = vector.load %arg2[%8, %c0_2] : memref<16x128xf32, #tpu.memory_space<vmem>>, vector<16x128xf32>
    %10 = tpu.reciprocal %7 {approx = true} : vector<16x128xf32> -> vector<16x128xf32>
    %11 = arith.mulf %7, %10 : vector<16x128xf32>
    %cst_3 = arith.constant 2.000000e+00 : f32
    %12 = vector.broadcast %cst_3 : f32 to vector<16x128xf32>
    %13 = arith.subf %12, %11 : vector<16x128xf32>
    %14 = arith.mulf %10, %13 : vector<16x128xf32>
    %15 = arith.subf %7, %9 : vector<16x128xf32>
    %16 = arith.mulf %15, %14 : vector<16x128xf32>
    %17 = arith.mulf %16, %16 : vector<16x128xf32>
    %18 = vector.shape_cast %17 : vector<16x128xf32> to vector<2x8x128xf32>
    %cst_4 = arith.constant dense<0.000000e+00> : vector<8x128xf32>
    %19 = vector.multi_reduction <add>, %18, %cst_4 [0] : vector<2x8x128xf32> to vector<8x128xf32>
    %20 = arith.addf %3, %19 : vector<8x128xf32>
    %c1_i32 = arith.constant 1 : i32
    %c0_5 = arith.constant 0 : index
    %c0_6 = arith.constant 0 : index
    %21 = vector.load %arg4[%c0_5, %c0_6] : memref<8x128xf32, #tpu.memory_space<vmem>>, vector<8x128xf32>
    %22 = arith.addf %21, %20 : vector<8x128xf32>
    %c0_7 = arith.constant 0 : index
    %c0_8 = arith.constant 0 : index
    %23 = vector.load %arg4[%c0_7, %c0_8] : memref<8x128xf32, #tpu.memory_space<vmem>>, vector<8x128xf32>
    tpu.vector_store %arg4[%c0_7, %c0_8], %22 {strides = array<i32>} : memref<8x128xf32, #tpu.memory_space<vmem>>, vector<8x128xf32>,
    return
  }
  func.func @transform_0(%arg0: i32, %arg1: i32) -> (i32, i32) {
    %c1_i32 = arith.constant 1 : i32
    %0 = arith.muli %arg0, %c1_i32 : i32
    %1 = arith.addi %0, %arg1 : i32
    %c0_i32 = arith.constant 0 : i32
    %2 = arith.minsi %1, %c0_i32 : i32
    %c0_i32_0 = arith.constant 0 : i32
    %c0_i32_1 = arith.constant 0 : i32
    return %2, %c0_i32_0 : i32, i32
  }
  func.func @transform_1(%arg0: i32, %arg1: i32) -> (i32, i32) {
    %c1_i32 = arith.constant 1 : i32
    %0 = arith.muli %arg0, %c1_i32 : i32
    %1 = arith.addi %0, %arg1 : i32
    %c0_i32 = arith.constant 0 : i32
    %2 = arith.minsi %1, %c0_i32 : i32
    %c0_i32_0 = arith.constant 0 : i32
    %c0_i32_1 = arith.constant 0 : i32
    return %2, %c0_i32_0 : i32, i32
  }
  func.func @transform_2(%arg0: i32, %arg1: i32) -> (i32, i32) {
    %c0_i32 = arith.constant 0 : i32
    %c0_i32_0 = arith.constant 0 : i32
    return %arg0, %c0_i32 : i32, i32
  }
}

</mosaic_0001>

<llo_original>
// kernel: tpu_custom_call.1
$region0: #{tpu_custom_call.1}
  #allocation0 [shape = 'u32[]', space=smem, size = 0x4, offset = 0x4, fixed_abs, tag = 'smem constant byte address 0x4 - core index']
  #allocation1 [shape = 'u32[72,128]{1,0:T(1,128)}', space=vmem, size = 0x9000, scoped, tag = 'internal scratch']
  %s0 = inlined_call_operand.hbm [shape: f32[16,128], index: 0, kind: input, shape index: {}]
  %s1 = inlined_call_operand.hbm [shape: f32[16,128], index: 1, kind: input, shape index: {}]
  %s2 = inlined_call_operand.hbm [shape: f32[8,128], index: 2, kind: output, shape index: {}]
  %s3 = sld [smem:[#allocation0]]
  $region30: #{tpu_custom_call.1} parent=0
    _
  %s5 = ssub.s32 1, %s3
  %s6 = scalar_select 0, %s5, %s3
  $region1: #{tpu_custom_call.1} parent=0
    #allocation2 [shape = 'u8[8192]{0}', space=vmem, size = 0x2000, scoped, tag = 'input window, operand 0, single buffered']
    #allocation3 [shape = 's32[1]{0}', space=sflag, size = 0x4, scoped, tag = 'scoped memory for tpu_custom_call.1']
    #allocation4 [shape = 's32[1]{0}', space=sflag, size = 0x4, scoped, tag = 'scoped memory for tpu_custom_call.1']
    #allocation5 [shape = 'u8[8192]{0}', space=vmem, size = 0x2000, scoped, tag = 'input window, operand 1, single buffered']
    #allocation6 [shape = 's32[1]{0}', space=sflag, size = 0x4, scoped, tag = 'scoped memory for tpu_custom_call.1']
    #allocation7 [shape = 'u8[4096]{0}', space=vmem, size = 0x1000, scoped, tag = 'output window, operand 0, single buffered']
    %7 = vsyncpa [#allocation3], 0
    %8 = vsyncpa [#allocation6], 0
    %9 = vsyncpa [#allocation4], 0
    // Predicated region
    $region2: #{tpu_custom_call.1} parent=1 // pred_check
      _
    $region3: #{tpu_custom_call.1} parent=1 // pred_check_branch
      %11 = sbr.rel (0) target = $region5
    $region4: #{tpu_custom_call.1} parent=1 // pred_region
      %s12 = sadd.s32 0, 0
      %p13 = scmp.lt.s32.totalorder %s12, 0
      %s14 = scalar_select %p13, %s12, 0
      %s15 = smul.u32 2, %s14
      %17 = vsyncadd [#allocation3], 0
      %s18 = smul.addr %s15, 8
      %s19 = scalar_lea.hbm %s0, %s18
      %s20 = sshll.u32 %s19, 4
      %s21 = int_to_ptr.hbm [resolvable:$true] %s20
      %s22 = sshll.u32 [#allocation2], 4
      %s23 = int_to_ptr.vmem [resolvable:$true] %s22
      %28 = dma.hbm_to_vmem [thread:$0]  %s21, 256, %s23, [#allocation3], 128, 128, 8
    $region5: #{tpu_custom_call.1} parent=1 // pred_fallthru
      _
    // Predicated region
    $region6: #{tpu_custom_call.1} parent=1 // pred_check
      _
    $region7: #{tpu_custom_call.1} parent=1 // pred_check_branch
      %30 = sbr.rel (0) target = $region9
    $region8: #{tpu_custom_call.1} parent=1 // pred_region
      %s31 = sadd.s32 0, 0
      %p32 = scmp.lt.s32.totalorder %s31, 0
      %s33 = scalar_select %p32, %s31, 0
      %s34 = smul.u32 2, %s33
      %36 = vsyncadd [#allocation6], 0
      %s37 = smul.addr %s34, 8
      %s38 = scalar_lea.hbm %s1, %s37
      %s39 = sshll.u32 %s38, 4
      %s40 = int_to_ptr.hbm [resolvable:$true] %s39
      %s41 = sshll.u32 [#allocation5], 4
      %s42 = int_to_ptr.vmem [resolvable:$true] %s41
      %47 = dma.hbm_to_vmem [thread:$0]  %s40, 256, %s42, [#allocation6], 128, 128, 8
    $region9: #{tpu_custom_call.1} parent=1 // pred_fallthru
      _
    // Predicated region
    $region10: #{tpu_custom_call.1} parent=1 // pred_check
      _
    $region11: #{tpu_custom_call.1} parent=1 // pred_check_branch
      %49 = sbr.rel (0) target = $region13
    $region12: #{tpu_custom_call.1} parent=1 // pred_region
      %51 = dma.done [#allocation3], 256
    $region13: #{tpu_custom_call.1} parent=1 // pred_fallthru
      _
    // Predicated region
    $region14: #{tpu_custom_call.1} parent=1 // pred_check
      _
    $region15: #{tpu_custom_call.1} parent=1 // pred_check_branch
      %53 = sbr.rel (0) target = $region17
    $region16: #{tpu_custom_call.1} parent=1 // pred_region
      %55 = dma.done [#allocation6], 256
    $region17: #{tpu_custom_call.1} parent=1 // pred_fallthru
      _
    %s56 = sadd.s32 0, 0
    %p57 = scmp.lt.s32.totalorder %s56, 0
    %s58 = scalar_select %p57, %s56, 0
    %s59 = smul.u32 2, %s58
    %s60 = sadd.s32 0, 0
    %p61 = scmp.lt.s32.totalorder %s60, 0
    %s62 = scalar_select %p61, %s60, 0
    %s63 = smul.u32 2, %s62
    %p64 = scmp.eq.s32.totalorder 0, 0
    // Predicated region
    $region18: #{tpu_custom_call.1} parent=1 // pred_check
      %p65 = pneg %p64
    $region19: #{tpu_custom_call.1} parent=1 // pred_check_branch
      %67 = sbr.rel (%p65) target = $region21
    $region20: #{tpu_custom_call.1} parent=1 // pred_region
      %68 = vst [vmem:[#allocation7] sm:$0xff] 0.0
    $region21: #{tpu_custom_call.1} parent=1 // pred_fallthru
      _
    %v69 = vld [vmem:[#allocation5] sm:$0xff]
    %v70 = vld [vmem:[#allocation5 + $0x8] sm:$0xff]
    %v71 = vld [vmem:[#allocation2] sm:$0xff]
    %v72 = vld [vmem:[#allocation2 + $0x8] sm:$0xff]
    %v73 = vrcp.pop %v69
    %v74 = vrcp.pop %v70
    %v75 = vmul.f32 %v69, %v73
    %v76 = vmul.f32 %v70, %v74
    %v77 = vsub.f32 2.0, %v75
    %v78 = vsub.f32 2.0, %v76
    %v79 = vmul.f32 %v73, %v77
    %v80 = vmul.f32 %v74, %v78
    %v81 = vsub.f32 %v69, %v71
    %v82 = vsub.f32 %v70, %v72
    %v83 = vmul.f32 %v81, %v79
    %v84 = vmul.f32 %v82, %v80
    %v85 = vmul.f32 %v83, %v83
    %v86 = vmul.f32 %v84, %v84
    %v87 = vadd.f32 %v85, %v86
    %v88 = vadd.f32 %v87, 0.0
    %v89 = vld [vmem:[#allocation7] sm:$0xff]
    %v90 = vadd.f32 %v89, %v88
    %91 = vst [vmem:[#allocation7] sm:$0xff] %v90
    // Predicated region
    $region22: #{tpu_custom_call.1} parent=1 // pred_check
      _
    $region23: #{tpu_custom_call.1} parent=1 // pred_check_branch
      %93 = sbr.rel (0) target = $region25
    $region24: #{tpu_custom_call.1} parent=1 // pred_region
      %95 = vsyncadd [#allocation4], 0
      %s97 = sshll.u32 [#allocation7], 4
      %s98 = int_to_ptr.vmem [resolvable:$true] %s97
      %s99 = sshll.u32 %s2, 4
      %s100 = int_to_ptr.hbm [resolvable:$true] %s99
      %102 = dma.vmem_to_hbm [thread:$0]  %s98, 128, %s100, [#allocation4]
    $region25: #{tpu_custom_call.1} parent=1 // pred_fallthru
      _
    // Predicated region
    $region26: #{tpu_custom_call.1} parent=1 // pred_check
      _
    $region27: #{tpu_custom_call.1} parent=1 // pred_check_branch
      %104 = sbr.rel (0) target = $region29
    $region28: #{tpu_custom_call.1} parent=1 // pred_region
      %106 = dma.done [#allocation4], 128
    $region29: #{tpu_custom_call.1} parent=1 // pred_fallthru
      _
    %107 = vsyncpa [#allocation3], 1
    %108 = vsyncpa [#allocation6], 1
    %109 = vsyncpa [#allocation4], 1

</llo_original>
